<compile_context>
chip_gen: v5e
topology: v5e:2x2
jax: 0.10.0
libtpu: 0.0.40
codegen_flags: <defaults>
</compile_context>

<pallas_src>
import functools

import jax
import jax.numpy as jnp
from jax import lax
from jax.experimental import pallas as pl
from jax.experimental.pallas import tpu as pltpu

LANE = 128
ROW_ALIGN = 16                       # sublane-pack friendly for bf16 row tiles
DEFAULT_VMEM_BUDGET = 48 << 20       # v7x-safe (64 MiB physical per TensorCore)


def _round_up(x, m):
    return ((x + m - 1) // m) * m


def plan_tiles(num_nodes, num_classes, vmem_budget=DEFAULT_VMEM_BUDGET):
    """Pick (row_tile, padded_nodes, padded_classes) for the streamed path.

    The row tile is sized so that two bf16 A row-block buffers + the resident
    bf16 H + the f32 h0/out row blocks fit the VMEM budget with headroom.
    The resident path reuses the same n_pad / c_pad so one cached A' serves both.
    """
    c_pad = _round_up(max(num_classes, 1), LANE)
    n_aligned = _round_up(num_nodes, ROW_ALIGN)
    usable = int(vmem_budget * 0.75)                  # headroom for compiler scratch
    fixed = 2 * n_aligned * c_pad * 2                 # resident bf16 H (double-buffered)
    per_row = 2 * n_aligned * 2 + 4 * c_pad * 4       # bf16 A row (x2 bufs) + f32 h0/out rows
    tm = (usable - fixed) // max(per_row, 1)
    tm = (tm // ROW_ALIGN) * ROW_ALIGN
    tm = max(ROW_ALIGN, min(256, tm, n_aligned))
    n_pad = _round_up(num_nodes, tm)
    # TODO(synk): graphs whose dense (TM, N) adjacency panel + resident H cannot
    # fit VMEM need a K-inner reduction grid / sparse operator instead.
    return tm, n_pad, c_pad


def _resident_vmem_need(n_pad, f, c_pad):
    """Bytes needed to keep the whole fused forward resident in VMEM."""
    a = n_pad * n_pad * 2                       # bf16 A'
    x = n_pad * f * 2                           # bf16 X
    w = f * c_pad * 2                           # bf16 W
    b = c_pad * 4                               # f32 bias row
    out = n_pad * c_pad * 4                     # f32 output
    scratch = 2 * n_pad * c_pad * 2             # 2x bf16 ping-pong H
    temps = 5 * n_pad * c_pad * 4               # f32 h0 / h_new / epilogue temporaries
    return a + x + w + b + out + scratch + temps


# --------------------------------------------------------------------------- #
# Kernels
# --------------------------------------------------------------------------- #
def _masked_log_softmax(h, num_classes):
    """Lane-dense log_softmax over the (padded) class axis."""
    col = lax.broadcasted_iota(jnp.int32, h.shape, 1)
    valid = col < num_classes
    m = jnp.max(jnp.where(valid, h, -jnp.inf), axis=1, keepdims=True)
    z = h - m
    p = jnp.where(valid, jnp.exp(z), 0.0)
    lse = jnp.log(jnp.sum(p, axis=1, keepdims=True))
    return z - lse


def _fused_forward_kernel(x_ref, w_ref, b_ref, a_ref, out_ref, h_a, h_b,
                          *, K, alpha, num_classes):
    """Entire forward in one shot (resident path).

    x_ref : (N_pad, F)      bf16   w_ref : (F, Cp)   bf16   b_ref : (1, Cp) f32
    a_ref : (N_pad, N_pad)  bf16   -- folded adjacency, loaded into VMEM once
    out_ref: (N_pad, Cp)    f32    -- masked log_softmax result
    h_a/h_b: (N_pad, Cp)    bf16   -- ping-pong buffers for intermediate H
    """
    h0 = (jnp.dot(x_ref[...], w_ref[...], preferred_element_type=jnp.float32)
          + b_ref[...])
    bufs = (h_a, h_b)
    bufs[0][...] = h0.astype(jnp.bfloat16)
    h_new = h0
    for t in range(K):                       # K is a small Python int: unrolled
        src = bufs[t % 2]
        h_new = (jnp.dot(a_ref[...], src[...],
                         preferred_element_type=jnp.float32)
                 + alpha * h0)
        if t < K - 1:
            bufs[(t + 1) % 2][...] = h_new.astype(jnp.bfloat16)
    out_ref[...] = _masked_log_softmax(h_new, num_classes)


def _linear_kernel(x_ref, w_ref, b_ref, out_ref):
    """Row block of H0 = X @ W + b.  bf16 operands, f32 accumulate (MXU)."""
    out_ref[...] = (
        jnp.dot(x_ref[...], w_ref[...], preferred_element_type=jnp.float32)
        + b_ref[...]
    )


def _propagate_kernel(a_ref, h_ref, h0_ref, out_ref, *, alpha, num_classes, final):
    """One row block of: H_new = A' @ H + alpha * H0, with A' = (1-alpha)*A_hat.

    a_ref  : (TM, N_pad)  bf16   -- streamed row panel of the folded adjacency
    h_ref  : (N_pad, Cp)  bf16   -- previous H, fully resident in VMEM
    h0_ref : (TM, Cp)     f32    -- residual term
    out_ref: (TM, Cp)     bf16 (intermediate step) or f32 log_softmax (final)
    """
    ah = jnp.dot(a_ref[...], h_ref[...], preferred_element_type=jnp.float32)
    h_new = ah + alpha * h0_ref[...]
    if final:
        out_ref[...] = _masked_log_softmax(h_new, num_classes)
    else:
        out_ref[...] = h_new.astype(out_ref.dtype)   # bf16 intermediate H


# --------------------------------------------------------------------------- #
# Wrapper
# --------------------------------------------------------------------------- #
def ctg_net_forward(x, w, b, a_prop, *, K, alpha,
                    vmem_budget=DEFAULT_VMEM_BUDGET, force_streamed=False):
    """Full Net forward.  `a_prop` is the pre-folded, padded, bf16 propagation
    operator from build_propagation_operator (built once, cached=True)."""
    assert K >= 1, "K >= 1 expected for CTGConv propagation"
    n, f = x.shape
    c = w.shape[1]
    tm, n_pad, c_pad = plan_tiles(n, c, vmem_budget)
    assert a_prop.shape == (n_pad, n_pad), (a_prop.shape, n_pad)

    # Lane-dense, row-padded operands (bf16 MXU inputs, f32 bias).
    x_p = jnp.zeros((n_pad, f), jnp.bfloat16).at[:n].set(x.astype(jnp.bfloat16))
    w_p = jnp.zeros((f, c_pad), jnp.bfloat16).at[:, :c].set(w.astype(jnp.bfloat16))
    b_p = jnp.zeros((1, c_pad), jnp.float32).at[:, :c].set(
        b.astype(jnp.float32).reshape(1, -1))

    resident_need = _resident_vmem_need(n_pad, f, c_pad)
    use_resident = (not force_streamed) and resident_need <= int(vmem_budget * 0.85)

    if use_resident:
        # ---- Fully fused, A'-resident forward (one pallas_call, no grid) ----
        vmem_limit = int(min(vmem_budget, max(resident_need + (8 << 20), 16 << 20)))
        kern = functools.partial(_fused_forward_kernel, K=K, alpha=float(alpha),
                                 num_classes=c)
        out = pl.pallas_call(
            kern,
            out_shape=jax.ShapeDtypeStruct((n_pad, c_pad), jnp.float32),
            scratch_shapes=[pltpu.VMEM((n_pad, c_pad), jnp.bfloat16),
                            pltpu.VMEM((n_pad, c_pad), jnp.bfloat16)],
            compiler_params=pltpu.CompilerParams(vmem_limit_bytes=vmem_limit),
            cost_estimate=pl.CostEstimate(
                flops=int(2 * n_pad * f * c_pad
                          + K * (2 * n_pad * n_pad * c_pad + 2 * n_pad * c_pad)),
                transcendentals=int(n_pad * c_pad),
                bytes_accessed=int(x_p.size * 2 + w_p.size * 2 + b_p.size * 4
                                   + a_prop.size * 2 + n_pad * c_pad * 4)),
        )(x_p, w_p, b_p, a_prop)
        return out[:n, :c]

    # ---- Streamed path: linear + K chained row-block propagation calls ------
    grid = (n_pad // tm,)

    # Actual VMEM requirement (double-buffered blocks) with headroom, capped at
    # the per-generation budget -- do NOT request the whole physical VMEM.
    vmem_need = max(
        2 * tm * n_pad * 2 + 2 * n_pad * c_pad * 2 + 4 * tm * c_pad * 4,  # propagate
        2 * tm * f * 2 + 2 * f * c_pad * 2 + 4 * tm * c_pad * 4,          # linear
    )
    vmem_limit = int(min(vmem_budget, max(vmem_need + (4 << 20), 16 << 20)))
    cparams = pltpu.CompilerParams(
        dimension_semantics=("parallel",),   # row blocks -> both TCs on v7x
        vmem_limit_bytes=vmem_limit,
    )

    row_spec = lambda shape: pl.BlockSpec(shape, lambda i: (i, 0))
    full_spec = lambda shape: pl.BlockSpec(shape, lambda i: (0, 0))

    # --- H0 = X @ W + b ------------------------------------------------------
    h0 = pl.pallas_call(
        _linear_kernel,
        out_shape=jax.ShapeDtypeStruct((n_pad, c_pad), jnp.float32),
        grid=grid,
        in_specs=[row_spec((tm, f)), full_spec((f, c_pad)), full_spec((1, c_pad))],
        out_specs=row_spec((tm, c_pad)),
        compiler_params=cparams,
        cost_estimate=pl.CostEstimate(
            flops=int(2 * n_pad * f * c_pad),
            transcendentals=0,
            bytes_accessed=int(x_p.size * 2 + w_p.size * 2 + b_p.size * 4
                               + n_pad * c_pad * 4)),
    )(x_p, w_p, b_p)

    # --- K propagation steps: H <- A' @ H + alpha * H0 ------------------------
    prop_bytes = int(a_prop.size * 2 + n_pad * c_pad * 2
                     + n_pad * c_pad * 4 + n_pad * c_pad * 4)

    def prop_call(h_in, final):
        kern = functools.partial(_propagate_kernel, alpha=float(alpha),
                                 num_classes=c, final=final)
        out_dtype = jnp.float32 if final else jnp.bfloat16
        return pl.pallas_call(
            kern,
            out_shape=jax.ShapeDtypeStruct((n_pad, c_pad), out_dtype),
            grid=grid,
            in_specs=[row_spec((tm, n_pad)),          # streamed A' row panel
                      full_spec((n_pad, c_pad)),      # resident previous H
                      row_spec((tm, c_pad))],         # residual H0 rows
            out_specs=row_spec((tm, c_pad)),
            compiler_params=cparams,
            cost_estimate=pl.CostEstimate(
                flops=int(2 * n_pad * n_pad * c_pad + 2 * n_pad * c_pad),
                transcendentals=int(n_pad * c_pad) if final else 0,
                bytes_accessed=prop_bytes),
        )(a_prop, h_in, h0)

    h = h0.astype(jnp.bfloat16)                 # bf16 MXU operand for step 1
    for _ in range(K - 1):
        h = prop_call(h, final=False)
    out = prop_call(h, final=True)              # fused masked log_softmax epilogue

    return out[:n, :c]


# --------------------------------------------------------------------------- #
# Graph preprocessing (plain JAX glue, built once / cached)
# --------------------------------------------------------------------------- #
def build_normalized_adjacency(edge_index, edge_weight, num_nodes):
    """Densify edge list and symmetrically normalize with self loops.

    Assumes edge_index is already bidirectional (as in PyG citation datasets);
    otherwise the dst<-src scatter yields an asymmetric operator."""
    src, dst = edge_index[0], edge_index[1]
    a = jnp.zeros((num_nodes, num_nodes), jnp.float32)
    a = a.at[dst, src].add(edge_weight)
    a = a + jnp.eye(num_nodes, dtype=jnp.float32)          # self loops
    deg = jnp.sum(a, axis=1)
    d = jnp.where(deg > 0, lax.rsqrt(deg), 0.0)
    return a * d[:, None] * d[None, :]                      # D^-1/2 A D^-1/2


def build_propagation_operator(a_hat, alpha, n_pad):
    """Fold (1-alpha) into A_hat once, zero-pad to the kernel row tiling, and
    store in bf16 (halves HBM/VMEM traffic for the dominant [N,N] stream)."""
    n = a_hat.shape[0]
    a = (1.0 - alpha) * a_hat
    a = jnp.zeros((n_pad, n_pad), jnp.float32).at[:n, :n].set(a)
    return a.astype(jnp.bfloat16)


# --------------------------------------------------------------------------- #
# References
# --------------------------------------------------------------------------- #
def reference_forward(x, w, b, a_hat, K, alpha):
    """Pure-JAX reference mirroring the kernel's mixed precision
    (bf16 matmul operands, f32 accumulation / blend / log_softmax)."""
    bf = jnp.bfloat16
    h0 = jnp.dot(x.astype(bf), w.astype(bf),
                 preferred_element_type=jnp.float32) + b[None, :]
    a_p = ((1.0 - alpha) * a_hat).astype(bf)
    h = h0
    for _ in range(K):
        h = jnp.dot(a_p, h.astype(bf),
                    preferred_element_type=jnp.float32) + alpha * h0
    return jax.nn.log_softmax(h, axis=1)


def reference_forward_f32(x, w, b, a_hat, K, alpha):
    h0 = x @ w + b[None, :]
    h = h0
    for _ in range(K):
        h = (1.0 - alpha) * (a_hat @ h) + alpha * h0
    return jax.nn.log_softmax(h, axis=1)


if __name__ == "__main__":
    # Small synthetic "citation dataset": N nodes, F features, C classes.
    N, F, C, E = 16, 32, 8, 48
    K, alpha = 3, 0.1

    key = jax.random.PRNGKey(0)
    kx, kw, kb, ke, kew = jax.random.split(key, 5)

    x = jax.random.normal(kx, (N, F), dtype=jnp.float32)
    w = jax.random.normal(kw, (F, C), dtype=jnp.float32) * (1.0 / jnp.sqrt(F))
    b = jax.random.normal(kb, (C,), dtype=jnp.float32) * 0.01

    edge_index = jax.random.randint(ke, (2, E), 0, N, dtype=jnp.int32)
    edge_weight = jax.random.uniform(kew, (E,), dtype=jnp.float32) + 0.1

    a_hat = build_normalized_adjacency(edge_index, edge_weight, N)

    # Built once and reused across forwards (CTGConv cached=True).
    _, n_pad, _ = plan_tiles(N, C)
    a_prop = build_propagation_operator(a_hat, alpha, n_pad)

    ref = reference_forward(x, w, b, a_hat, K, alpha)
    ref32 = reference_forward_f32(x, w, b, a_hat, K, alpha)

    # Resident (fully fused) path.
    out = ctg_net_forward(x, w, b, a_prop, K=K, alpha=alpha)
    out = jax.block_until_ready(out)
    assert out.shape == (N, C)
    err = jnp.max(jnp.abs(out - ref))
    assert jnp.allclose(out, ref, atol=1e-3, rtol=1e-3), f"fused mismatch {err}"
    err32 = jnp.max(jnp.abs(out - ref32))
    assert jnp.allclose(out, ref32, atol=0.15), f"fused f32 mismatch {err32}"
    assert jnp.allclose(jnp.sum(jnp.exp(out), axis=1), 1.0, atol=1e-3)

    # Streamed (chained row-block) path, forced for coverage.
    out_s = ctg_net_forward(x, w, b, a_prop, K=K, alpha=alpha, force_streamed=True)
    out_s = jax.block_until_ready(out_s)
    err_s = jnp.max(jnp.abs(out_s - ref))
    assert jnp.allclose(out_s, ref, atol=1e-3, rtol=1e-3), f"streamed mismatch {err_s}"
    assert jnp.allclose(jnp.sum(jnp.exp(out_s), axis=1), 1.0, atol=1e-3)

    print("KERNEL_OK")
</pallas_src>

<mosaic_0001>
module attributes {stable_mosaic.version = 11 : i64} {
  func.func @_fused_forward_kernel(%arg0: memref<16x32xbf16, #tpu.memory_space<vmem>>, %arg1: memref<32x128xbf16, #tpu.memory_space<vmem>>, %arg2: memref<1x128xf32, #tpu.memory_space<vmem>>, %arg3: memref<16x16xbf16, #tpu.memory_space<vmem>>, %arg4: memref<16x128xf32, #tpu.memory_space<vmem>>, %arg5: memref<16x128xbf16, #tpu.memory_space<vmem>>, %arg6: memref<16x128xbf16, #tpu.memory_space<vmem>>) attributes {dimension_semantics = [], scalar_prefetch = 0 : i64, scratch_operands = 2 : i64, tpu.core_type = #tpu.core_type<tc>} {
    %c0 = arith.constant 0 : index
    %c0_0 = arith.constant 0 : index
    %0 = vector.load %arg0[%c0, %c0_0] : memref<16x32xbf16, #tpu.memory_space<vmem>>, vector<16x32xbf16>
    %c0_1 = arith.constant 0 : index
    %c0_2 = arith.constant 0 : index
    %1 = vector.load %arg1[%c0_1, %c0_2] : memref<32x128xbf16, #tpu.memory_space<vmem>>, vector<32x128xbf16>
    %cst = arith.constant dense<0.000000e+00> : vector<16x128xf32>
    %2 = tpu.matmul %0, %1, %cst {dimension_numbers = #tpu.dot_dimension_numbers<[1], [0], [0], [1], [0, 0, 1, 1], [], []>} : vector<16x32xbf16>, vector<32x128xbf16>, vector<16x128xf32> -> vector<16x128xf32>
    %c0_3 = arith.constant 0 : index
    %c0_4 = arith.constant 0 : index
    %3 = vector.load %arg2[%c0_3, %c0_4] : memref<1x128xf32, #tpu.memory_space<vmem>>, vector<1x128xf32>
    %4 = vector.broadcast %3 : vector<1x128xf32> to vector<16x128xf32>
    %5 = arith.addf %2, %4 : vector<16x128xf32>
    %6 = arith.truncf %5 : vector<16x128xf32> to vector<16x128xbf16>
    %c0_5 = arith.constant 0 : index
    %c0_6 = arith.constant 0 : index
    %7 = vector.load %arg5[%c0_5, %c0_6] : memref<16x128xbf16, #tpu.memory_space<vmem>>, vector<16x128xbf16>
    tpu.vector_store %arg5[%c0_5, %c0_6], %6 {strides = array<i32>} : memref<16x128xbf16, #tpu.memory_space<vmem>>, vector<16x128xbf16>,
    %c0_7 = arith.constant 0 : index
    %c0_8 = arith.constant 0 : index
    %8 = vector.load %arg3[%c0_7, %c0_8] : memref<16x16xbf16, #tpu.memory_space<vmem>>, vector<16x16xbf16>
    %c0_9 = arith.constant 0 : index
    %c0_10 = arith.constant 0 : index
    %9 = vector.load %arg5[%c0_9, %c0_10] : memref<16x128xbf16, #tpu.memory_space<vmem>>, vector<16x128xbf16>
    %cst_11 = arith.constant dense<0.000000e+00> : vector<16x128xf32>
    %10 = tpu.matmul %8, %9, %cst_11 {dimension_numbers = #tpu.dot_dimension_numbers<[1], [0], [0], [1], [0, 0, 1, 1], [], []>} : vector<16x16xbf16>, vector<16x128xbf16>, vector<16x128xf32> -> vector<16x128xf32>
    %cst_12 = arith.constant 1.000000e-01 : f32
    %11 = vector.broadcast %cst_12 : f32 to vector<16x128xf32>
    %12 = arith.mulf %11, %5 : vector<16x128xf32>
    %13 = arith.addf %10, %12 : vector<16x128xf32>
    %14 = arith.truncf %13 : vector<16x128xf32> to vector<16x128xbf16>
    %c0_13 = arith.constant 0 : index
    %c0_14 = arith.constant 0 : index
    %15 = vector.load %arg6[%c0_13, %c0_14] : memref<16x128xbf16, #tpu.memory_space<vmem>>, vector<16x128xbf16>
    tpu.vector_store %arg6[%c0_13, %c0_14], %14 {strides = array<i32>} : memref<16x128xbf16, #tpu.memory_space<vmem>>, vector<16x128xbf16>,
    %c0_15 = arith.constant 0 : index
    %c0_16 = arith.constant 0 : index
    %16 = vector.load %arg3[%c0_15, %c0_16] : memref<16x16xbf16, #tpu.memory_space<vmem>>, vector<16x16xbf16>
    %c0_17 = arith.constant 0 : index
    %c0_18 = arith.constant 0 : index
    %17 = vector.load %arg6[%c0_17, %c0_18] : memref<16x128xbf16, #tpu.memory_space<vmem>>, vector<16x128xbf16>
    %cst_19 = arith.constant dense<0.000000e+00> : vector<16x128xf32>
    %18 = tpu.matmul %16, %17, %cst_19 {dimension_numbers = #tpu.dot_dimension_numbers<[1], [0], [0], [1], [0, 0, 1, 1], [], []>} : vector<16x16xbf16>, vector<16x128xbf16>, vector<16x128xf32> -> vector<16x128xf32>
    %cst_20 = arith.constant 1.000000e-01 : f32
    %19 = vector.broadcast %cst_20 : f32 to vector<16x128xf32>
    %20 = arith.mulf %19, %5 : vector<16x128xf32>
    %21 = arith.addf %18, %20 : vector<16x128xf32>
    %22 = arith.truncf %21 : vector<16x128xf32> to vector<16x128xbf16>
    %c0_21 = arith.constant 0 : index
    %c0_22 = arith.constant 0 : index
    %23 = vector.load %arg5[%c0_21, %c0_22] : memref<16x128xbf16, #tpu.memory_space<vmem>>, vector<16x128xbf16>
    tpu.vector_store %arg5[%c0_21, %c0_22], %22 {strides = array<i32>} : memref<16x128xbf16, #tpu.memory_space<vmem>>, vector<16x128xbf16>,
    %c0_23 = arith.constant 0 : index
    %c0_24 = arith.constant 0 : index
    %24 = vector.load %arg3[%c0_23, %c0_24] : memref<16x16xbf16, #tpu.memory_space<vmem>>, vector<16x16xbf16>
    %c0_25 = arith.constant 0 : index
    %c0_26 = arith.constant 0 : index
    %25 = vector.load %arg5[%c0_25, %c0_26] : memref<16x128xbf16, #tpu.memory_space<vmem>>, vector<16x128xbf16>
    %cst_27 = arith.constant dense<0.000000e+00> : vector<16x128xf32>
    %26 = tpu.matmul %24, %25, %cst_27 {dimension_numbers = #tpu.dot_dimension_numbers<[1], [0], [0], [1], [0, 0, 1, 1], [], []>} : vector<16x16xbf16>, vector<16x128xbf16>, vector<16x128xf32> -> vector<16x128xf32>
    %cst_28 = arith.constant 1.000000e-01 : f32
    %27 = vector.broadcast %cst_28 : f32 to vector<16x128xf32>
    %28 = arith.mulf %27, %5 : vector<16x128xf32>
    %29 = arith.addf %26, %28 : vector<16x128xf32>
    %30 = tpu.iota {dimensions = array<i32: 1>} : vector<16x128xi32>
    %c8_i32 = arith.constant 8 : i32
    %31 = vector.broadcast %c8_i32 : i32 to vector<16x128xi32>
    %32 = arith.cmpi slt, %30, %31 : vector<16x128xi32>
    %cst_29 = arith.constant 0xFF800000 : f32
    %33 = vector.broadcast %cst_29 : f32 to vector<16x128xf32>
    %34 = arith.select %32, %29, %33 : vector<16x128xi1>, vector<16x128xf32>
    %cst_30 = arith.constant dense<0xFF800000> : vector<16xf32>
    %35 = vector.multi_reduction <maximumf>, %34, %cst_30 [1] : vector<16x128xf32> to vector<16xf32>
    %36 = vector.shape_cast %35 : vector<16xf32> to vector<16x1xf32>
    %37 = vector.broadcast %36 : vector<16x1xf32> to vector<16x128xf32>
    %38 = arith.subf %29, %37 : vector<16x128xf32>
    %39 = math.exp %38 : vector<16x128xf32>
    %cst_31 = arith.constant 0.000000e+00 : f32
    %40 = vector.broadcast %cst_31 : f32 to vector<16x128xf32>
    %41 = arith.select %32, %39, %40 : vector<16x128xi1>, vector<16x128xf32>
    %cst_32 = arith.constant dense<0.000000e+00> : vector<16xf32>
    %42 = vector.multi_reduction <add>, %41, %cst_32 [1] : vector<16x128xf32> to vector<16xf32>
    %43 = vector.shape_cast %42 : vector<16xf32> to vector<16x1xf32>
    %44 = math.log %43 : vector<16x1xf32>
    %45 = vector.broadcast %44 : vector<16x1xf32> to vector<16x128xf32>
    %46 = arith.subf %38, %45 : vector<16x128xf32>
    %c0_33 = arith.constant 0 : index
    %c0_34 = arith.constant 0 : index
    %47 = vector.load %arg4[%c0_33, %c0_34] : memref<16x128xf32, #tpu.memory_space<vmem>>, vector<16x128xf32>
    tpu.vector_store %arg4[%c0_33, %c0_34], %46 {strides = array<i32>} : memref<16x128xf32, #tpu.memory_space<vmem>>, vector<16x128xf32>,
    return
  }
}

</mosaic_0001>

<llo_original>
// kernel: tpu_custom_call.1
$region0: #{tpu_custom_call.1}
  #allocation0 [shape = 'u32[]', space=smem, size = 0x4, offset = 0x4, fixed_abs, tag = 'smem constant byte address 0x4 - core index']
  #allocation1 [shape = 'u32[72,128]{1,0:T(1,128)}', space=vmem, size = 0x9000, scoped, tag = 'internal scratch']
  #allocation2 [shape = 'bf16[16,128]{1,0:T(8,128)(2,1)}', space=vmem, size = 0x1000, scoped, tag = 'scratch operand']
  #allocation3 [shape = 'bf16[16,128]{1,0:T(8,128)(2,1)}', space=vmem, size = 0x1000, scoped, tag = 'scratch operand']
  %s0 = inlined_call_operand.hbm [shape: bf16[16,32], index: 0, kind: input, shape index: {}]
  %s1 = inlined_call_operand.hbm [shape: bf16[32,128], index: 1, kind: input, shape index: {}]
  %s2 = inlined_call_operand.vmem [shape: f32[1,128], index: 2, kind: input, shape index: {}]
  %s3 = inlined_call_operand.hbm [shape: bf16[16,16], index: 3, kind: input, shape index: {}]
  %s4 = inlined_call_operand.hbm [shape: f32[16,128], index: 4, kind: output, shape index: {}]
  %s5 = sld [smem:[#allocation0]]
  $region38: #{tpu_custom_call.1} parent=0
    _
  %s7 = ssub.s32 1, %s5
  %s8 = scalar_select 0, %s7, %s5
  $region1: #{tpu_custom_call.1} parent=0
    #allocation4 [shape = 'u8[4096]{0}', space=vmem, size = 0x1000, scoped, tag = 'input window, operand 0, single buffered']
    #allocation5 [shape = 's32[1]{0}', space=sflag, size = 0x4, scoped, tag = 'scoped memory for tpu_custom_call.1']
    #allocation6 [shape = 's32[1]{0}', space=sflag, size = 0x4, scoped, tag = 'scoped memory for tpu_custom_call.1']
    #allocation7 [shape = 'u8[8192]{0}', space=vmem, size = 0x2000, scoped, tag = 'input window, operand 1, single buffered']
    #allocation8 [shape = 's32[1]{0}', space=sflag, size = 0x4, scoped, tag = 'scoped memory for tpu_custom_call.1']
    #allocation9 [shape = 'u8[4096]{0}', space=vmem, size = 0x1000, scoped, tag = 'input window, operand 3, single buffered']
    #allocation10 [shape = 'u8[8192]{0}', space=vmem, size = 0x2000, scoped, tag = 'output window, operand 0, single buffered']
    %9 = vsyncpa [#allocation5], 0
    %10 = vsyncpa [#allocation8], 0
    %11 = vsyncpa [#allocation6], 0
    // Predicated region
    $region2: #{tpu_custom_call.1} parent=1 // pred_check
      _
    $region3: #{tpu_custom_call.1} parent=1 // pred_check_branch
      %13 = sbr.rel (0) target = $region5
    $region4: #{tpu_custom_call.1} parent=1 // pred_region
      %15 = vsyncadd [#allocation5], 0
      %s16 = sshll.u32 %s0, 4
      %s17 = int_to_ptr.hbm [resolvable:$true] %s16
      %s18 = sshll.u32 [#allocation4], 4
      %s19 = int_to_ptr.vmem [resolvable:$true] %s18
      %24 = dma.hbm_to_vmem [thread:$0]  %s17, 128, %s19, [#allocation5], 64, 64, 4
    $region5: #{tpu_custom_call.1} parent=1 // pred_fallthru
      _
    // Predicated region
    $region6: #{tpu_custom_call.1} parent=1 // pred_check
      _
    $region7: #{tpu_custom_call.1} parent=1 // pred_check_branch
      %26 = sbr.rel (0) target = $region9
    $region8: #{tpu_custom_call.1} parent=1 // pred_region
      %28 = vsyncadd [#allocation8], 0
      %s29 = sshll.u32 %s1, 4
      %s30 = int_to_ptr.hbm [resolvable:$true] %s29
      %s31 = sshll.u32 [#allocation7], 4
      %s32 = int_to_ptr.vmem [resolvable:$true] %s31
      %37 = dma.hbm_to_vmem [thread:$0]  %s30, 256, %s32, [#allocation8], 64, 64, 4
    $region9: #{tpu_custom_call.1} parent=1 // pred_fallthru
      _
    // Predicated region
    $region10: #{tpu_custom_call.1} parent=1 // pred_check
      _
    $region11: #{tpu_custom_call.1} parent=1 // pred_check_branch
      %39 = sbr.rel (0) target = $region13
    $region12: #{tpu_custom_call.1} parent=1 // pred_region
      _
    $region13: #{tpu_custom_call.1} parent=1 // pred_fallthru
      _
    // Predicated region
    $region14: #{tpu_custom_call.1} parent=1 // pred_check
      _
    $region15: #{tpu_custom_call.1} parent=1 // pred_check_branch
      %41 = sbr.rel (0) target = $region17
    $region16: #{tpu_custom_call.1} parent=1 // pred_region
      %43 = vsyncadd [#allocation8], 0
      %s44 = sshll.u32 %s3, 4
      %s45 = int_to_ptr.hbm [resolvable:$true] %s44
      %s46 = sshll.u32 [#allocation9], 4
      %s47 = int_to_ptr.vmem [resolvable:$true] %s46
      %52 = dma.hbm_to_vmem [thread:$0]  %s45, 128, %s47, [#allocation8], 64, 64, 4
    $region17: #{tpu_custom_call.1} parent=1 // pred_fallthru
      _
    // Predicated region
    $region18: #{tpu_custom_call.1} parent=1 // pred_check
      _
    $region19: #{tpu_custom_call.1} parent=1 // pred_check_branch
      %54 = sbr.rel (0) target = $region21
    $region20: #{tpu_custom_call.1} parent=1 // pred_region
      %56 = dma.done [#allocation5], 128
    $region21: #{tpu_custom_call.1} parent=1 // pred_fallthru
      _
    // Predicated region
    $region22: #{tpu_custom_call.1} parent=1 // pred_check
      _
    $region23: #{tpu_custom_call.1} parent=1 // pred_check_branch
      %58 = sbr.rel (0) target = $region25
    $region24: #{tpu_custom_call.1} parent=1 // pred_region
      %60 = dma.done [#allocation8], 256
    $region25: #{tpu_custom_call.1} parent=1 // pred_fallthru
      _
    // Predicated region
    $region26: #{tpu_custom_call.1} parent=1 // pred_check
      _
    $region27: #{tpu_custom_call.1} parent=1 // pred_check_branch
      %62 = sbr.rel (0) target = $region29
    $region28: #{tpu_custom_call.1} parent=1 // pred_region
      %64 = dma.done [#allocation8], 128
    $region29: #{tpu_custom_call.1} parent=1 // pred_fallthru
      _
    %v66 = vld [vmem:[#allocation4] sm:$0xf]
    %v67 = vld [vmem:[#allocation4 + $0x4] sm:$0xf]
    %v68 = vld [vmem:[#allocation7] sm:$0xf]
    %v69 = vld [vmem:[#allocation7 + $0x4] sm:$0xf]
    %v70 = vld [vmem:[#allocation7 + $0x8] sm:$0xf]
    %v71 = vld [vmem:[#allocation7 + $0xc] sm:$0xf]
    %v72 = vld [vmem:[%s2] sm:$0x1]
    %v74 = vperm.slane %v72, 0
    %v78 = vunpack.c.l.b16 %v66
    %v79 = vunpack.c.l.b16 %v67
    %v80 = vpack.c.b16 %v79, %v78
    %v85 = vunpack.c.l.b16 %v68
    %v86 = vunpack.c.l.b16 %v69
    %v87 = vunpack.c.l.b16 %v70
    %v88 = vunpack.c.l.b16 %v71
    %v89 = vpack.c.b16 %v86, %v85
    %v90 = vpack.c.b16 %v88, %v87
    %vm93 = vcmask 261120
    %v95 = vsel %vm93, %v80, 0
    %97 = vmatpush.bf16.msra.mxu0 0
    %98 = vmatpush.bf16.msra.mxu0 0
    %99 = vmatpush.bf16.msra.mxu0 0
    %100 = vmatpush.bf16.msra.mxu0 0
    %101 = vmatpush.bf16.msra.mxu0 0
    %102 = vmatpush.bf16.msra.mxu0 0
    %103 = vmatpush.bf16.msra.mxu0 %v90
    %104 = vmatpush.bf16.msra.mxu0 %v89
    %105 = vmatmul.bf16.gmra.mxu0 %v95
    %v106 = vpop.f32.mrf.mxu0
    %v107 = vadd.f32 %v74, %v106
    %v108 = vpop.f32.mrf.mxu0
    %v109 = vadd.f32 %v74, %v108
    %110 = vdwg.mxu0
    %v111 = vpack.c.bf16 %v107, %v107
    %v112 = vpack.c.bf16 %v109, %v109
    %113 = vst [vmem:[#allocation2] sm:$0xf] %v111
    %114 = vst [vmem:[#allocation2 + $0x4] sm:$0xf] %v112
    %v115 = vld [vmem:[#allocation9] sm:$0xf]
    %v116 = vld [vmem:[#allocation9 + $0x4] sm:$0xf]
    %v117 = vld [vmem:[#allocation2] sm:$0xf]
    %v118 = vld [vmem:[#allocation2 + $0x4] sm:$0xf]
    %v119 = vmul.f32 %v107, 0.1
    %v120 = vmul.f32 %v109, 0.1
    %v123 = vunpack.c.l.b16 %v115
    %v124 = vunpack.c.l.b16 %v116
    %v125 = vpack.c.b16 %v124, %v123
    %v128 = vunpack.c.l.b16 %v117
    %v129 = vunpack.c.l.b16 %v118
    %v130 = vpack.c.b16 %v129, %v128
    %vm132 = vcmask 130048
    %v134 = vsel %vm132, %v125, 0
    %136 = vmatpush.bf16.msra.mxu0 0
    %137 = vmatpush.bf16.msra.mxu0 0
    %138 = vmatpush.bf16.msra.mxu0 0
    %139 = vmatpush.bf16.msra.mxu0 0
    %140 = vmatpush.bf16.msra.mxu0 0
    %141 = vmatpush.bf16.msra.mxu0 0
    %142 = vmatpush.bf16.msra.mxu0 0
    %143 = vmatpush.bf16.msra.mxu0 %v130
    %144 = vmatmul.bf16.gmra.mxu0 %v134
    %v145 = vpop.f32.mrf.mxu0
    %v146 = vadd.f32 %v119, %v145
    %v147 = vpop.f32.mrf.mxu0
    %v148 = vadd.f32 %v120, %v147
    %149 = vdwg.mxu0
    %v150 = vpack.c.bf16 %v146, %v146
    %v151 = vpack.c.bf16 %v148, %v148
    %152 = vst [vmem:[#allocation3] sm:$0xf] %v150
    %153 = vst [vmem:[#allocation3 + $0x4] sm:$0xf] %v151
    %v154 = vld [vmem:[#allocation9] sm:$0xf]
    %v155 = vld [vmem:[#allocation9 + $0x4] sm:$0xf]
    %v156 = vld [vmem:[#allocation3] sm:$0xf]
    %v157 = vld [vmem:[#allocation3 + $0x4] sm:$0xf]
    %v160 = vunpack.c.l.b16 %v154
    %v161 = vunpack.c.l.b16 %v155
    %v162 = vpack.c.b16 %v161, %v160
    %v165 = vunpack.c.l.b16 %v156
    %v166 = vunpack.c.l.b16 %v157
    %v167 = vpack.c.b16 %v166, %v165
    %v170 = vsel %vm132, %v162, 0
    %172 = vmatpush.bf16.msra.mxu0 0
    %173 = vmatpush.bf16.msra.mxu0 0
    %174 = vmatpush.bf16.msra.mxu0 0
    %175 = vmatpush.bf16.msra.mxu0 0
    %176 = vmatpush.bf16.msra.mxu0 0
    %177 = vmatpush.bf16.msra.mxu0 0
    %178 = vmatpush.bf16.msra.mxu0 0
    %179 = vmatpush.bf16.msra.mxu0 %v167
    %180 = vmatmul.bf16.gmra.mxu0 %v170
    %v181 = vpop.f32.mrf.mxu0
    %v182 = vadd.f32 %v119, %v181
    %v183 = vpop.f32.mrf.mxu0
    %v184 = vadd.f32 %v120, %v183
    %185 = vdwg.mxu0
    %v186 = vpack.c.bf16 %v182, %v182
    %v187 = vpack.c.bf16 %v184, %v184
    %188 = vst [vmem:[#allocation2] sm:$0xf] %v186
    %189 = vst [vmem:[#allocation2 + $0x4] sm:$0xf] %v187
    %v190 = vld [vmem:[#allocation9] sm:$0xf]
    %v191 = vld [vmem:[#allocation9 + $0x4] sm:$0xf]
    %v192 = vld [vmem:[#allocation2] sm:$0xf]
    %v193 = vld [vmem:[#allocation2 + $0x4] sm:$0xf]
    %v196 = vunpack.c.l.b16 %v190
    %v197 = vunpack.c.l.b16 %v191
    %v198 = vpack.c.b16 %v197, %v196
    %v201 = vunpack.c.l.b16 %v192
    %v202 = vunpack.c.l.b16 %v193
    %v203 = vpack.c.b16 %v202, %v201
    %v206 = vsel %vm132, %v198, 0
    %208 = vmatpush.bf16.msra.mxu0 0
    %209 = vmatpush.bf16.msra.mxu0 0
    %210 = vmatpush.bf16.msra.mxu0 0
    %211 = vmatpush.bf16.msra.mxu0 0
    %212 = vmatpush.bf16.msra.mxu0 0
    %213 = vmatpush.bf16.msra.mxu0 0
    %214 = vmatpush.bf16.msra.mxu0 0
    %215 = vmatpush.bf16.msra.mxu0 %v203
    %216 = vmatmul.bf16.gmra.mxu0 %v206
    %v217 = vpop.f32.mrf.mxu0
    %v218 = vadd.f32 %v119, %v217
    %v219 = vpop.f32.mrf.mxu0
    %v220 = vadd.f32 %v120, %v219
    %221 = vdwg.mxu0
    %v222 = vlaneseq
    %v223 = vand.u32 %v222, 127
    %vm224 = vcmp.lt.s32.totalorder %v223, 8
    %v225 = vsel %vm224, %v218, -inf
    %v226 = vsel %vm224, %v220, -inf
    %227 = vmax.xlane.f32.xlu0 %v225
    %v228 = vpop.xlane.xlu0 %227
    %229 = vmax.xlane.f32.xlu0 %v226
    %v230 = vpop.xlane.xlu0 %229
    %v231 = vsub.f32 %v218, %v228
    %v232 = vsub.f32 %v220, %v230
    %v233 = vmul.f32 %v231, 1.442695
    %v234 = vpow.pop %v233
    %v235 = vmul.f32 %v232, 1.442695
    %v236 = vpow.pop %v235
    %v237 = vsel %vm224, %v234, 0.0
    %v238 = vsel %vm224, %v236, 0.0
    %239 = vadd.xlane.f32.xlu0 %v237
    %v240 = vpop.xlane.xlu0 %239
    %241 = vadd.xlane.f32.xlu0 %v238
    %v242 = vpop.xlane.xlu0 %241
    %v243 = vlog2.pop %v240
    %v244 = vmul.f32 %v243, 0.6931472
    %v245 = vlog2.pop %v242
    %v246 = vmul.f32 %v245, 0.6931472
    %v247 = vsub.f32 %v231, %v244
    %v248 = vsub.f32 %v232, %v246
    %249 = vst [vmem:[#allocation10] sm:$0xff] %v247
    %250 = vst [vmem:[#allocation10 + $0x8] sm:$0xff] %v248
    // Predicated region
    $region30: #{tpu_custom_call.1} parent=1 // pred_check
      _
    $region31: #{tpu_custom_call.1} parent=1 // pred_check_branch
      %252 = sbr.rel (0) target = $region33
    $region32: #{tpu_custom_call.1} parent=1 // pred_region
      %254 = vsyncadd [#allocation6], 0
      %s255 = sshll.u32 [#allocation10], 4
      %s256 = int_to_ptr.vmem [resolvable:$true] %s255
      %s257 = sshll.u32 %s4, 4
      %s258 = int_to_ptr.hbm [resolvable:$true] %s257
      %263 = dma.vmem_to_hbm [thread:$0]  %s256, 256, %s258, [#allocation6], 128, 128, 8
    $region33: #{tpu_custom_call.1} parent=1 // pred_fallthru
      _
    // Predicated region
    $region34: #{tpu_custom_call.1} parent=1 // pred_check
      _
    $region35: #{tpu_custom_call.1} parent=1 // pred_check_branch
      %265 = sbr.rel (0) target = $region37
    $region36: #{tpu_custom_call.1} parent=1 // pred_region
      %267 = dma.done [#allocation6], 256
    $region37: #{tpu_custom_call.1} parent=1 // pred_fallthru
      _
    %268 = vsyncpa [#allocation5], 1
    %269 = vsyncpa [#allocation8], 1
    %270 = vsyncpa [#allocation6], 1

</llo_original>
